<compile_context>
chip_gen: v5e
topology: v5e:2x2
jax: 0.10.0
libtpu: 0.0.40
codegen_flags: <defaults>
</compile_context>

<pallas_src>
import functools
import math

import jax
import jax.numpy as jnp
from jax.experimental import pallas as pl
from jax.experimental.pallas import tpu as pltpu


def make_pe_table(d_model: int, max_len: int = 5000) -> jnp.ndarray:
    """Same construction as the PyTorch __init__, returned as (max_len, d_model)."""
    position = jnp.arange(max_len, dtype=jnp.float32)[:, None]            # (max_len, 1)
    div_term = jnp.exp(
        jnp.arange(0, d_model, 2, dtype=jnp.float32) * (-math.log(10000.0) / d_model)
    )                                                                      # (d_model/2,)
    pe = jnp.zeros((max_len, d_model), dtype=jnp.float32)
    pe = pe.at[:, 0::2].set(jnp.sin(position * div_term))
    pe = pe.at[:, 1::2].set(jnp.cos(position * div_term))
    return pe


# murmur3 fmix32 constants, expressed as wrapping int32.
_GOLDEN = -1640531527     # 0x9E3779B9
_FMIX_C1 = -2048144789    # 0x85EBCA6B
_FMIX_C2 = -1028477387    # 0xC2B2AE35


def _srl(v, nbits):
    """Logical (unsigned) right shift on int32 values."""
    return jax.lax.shift_right_logical(v, jnp.full(v.shape, nbits, jnp.int32))


def _pe_add_dropout_kernel(seed_ref, x_ref, pe_ref, o_ref, *,
                           p: float, training: bool,
                           tile_b: int, tile_f: int, total_f: int):
    # x_ref: (tile_b, tile_f)   pe_ref: (1, tile_f)   broadcast add over sublanes
    y = x_ref[...] + pe_ref[...]
    if training and p > 0.0:
        # Global element index of every element of this block (mask is therefore
        # independent of the tiling / grid order).
        b0 = pl.program_id(1) * tile_b
        f0 = pl.program_id(0) * tile_f
        rows = jax.lax.broadcasted_iota(jnp.int32, y.shape, 0) + b0
        cols = jax.lax.broadcasted_iota(jnp.int32, y.shape, 1) + f0
        h = rows * total_f + cols
        h = h ^ (seed_ref[0] * jnp.int32(_GOLDEN))
        # murmur3 finalizer: a handful of int32 VPU ops with good avalanche.
        h = h ^ _srl(h, 16)
        h = h * jnp.int32(_FMIX_C1)
        h = h ^ _srl(h, 13)
        h = h * jnp.int32(_FMIX_C2)
        h = h ^ _srl(h, 16)
        r24 = _srl(h, 8)                                   # uniform in [0, 2^24)
        keep = r24 >= jnp.int32(int(round(p * (1 << 24))))  # integer-threshold compare
        y = jnp.where(keep, y * (1.0 / (1.0 - p)), 0.0)      # inverted dropout
    o_ref[...] = y.astype(o_ref.dtype)


def _choose_tiles(batch: int, feat: int, itemsize: int):
    # Second-to-last block dim: multiple of 8 or the full batch extent.
    tile_b = batch if batch <= 8 else 8
    # Aim for ~2 MiB per x block (safe with double buffering on v7x's 64 MiB VMEM);
    # last block dim must be a multiple of 128 or the full extent.
    target_bytes = 2 * 1024 * 1024
    tile_f = (target_bytes // (tile_b * itemsize)) // 128 * 128
    tile_f = max(tile_f, 128)
    if tile_f >= feat:
        tile_f = feat
    return tile_b, tile_f


def positional_encoding(x, pe_table, *, p: float = 0.1, training: bool = True, seed: int = 0):
    """x: (B, S, D); pe_table: (max_len, D).  Returns dropout(x + pe[:S])."""
    B, S, D = x.shape
    F = S * D
    pe_flat = pe_table[:S].reshape(1, F).astype(x.dtype)   # match activation dtype
    x_flat = x.reshape(B, F)

    tile_b, tile_f = _choose_tiles(B, F, x.dtype.itemsize)
    grid = (pl.cdiv(F, tile_f), pl.cdiv(B, tile_b))        # b is the inner (fast) axis

    kernel = functools.partial(
        _pe_add_dropout_kernel, p=float(p), training=bool(training),
        tile_b=tile_b, tile_f=tile_f, total_f=F)
    seed_arr = jnp.array([seed], dtype=jnp.int32)

    out_flat = pl.pallas_call(
        kernel,
        out_shape=jax.ShapeDtypeStruct((B, F), x.dtype),
        grid_spec=pltpu.PrefetchScalarGridSpec(
            num_scalar_prefetch=1,
            grid=grid,
            in_specs=[
                pl.BlockSpec((tile_b, tile_f), lambda f, b, seed: (b, f)),
                # pe depends only on the f-tile -> stays resident while b iterates.
                pl.BlockSpec((1, tile_f), lambda f, b, seed: (0, f)),
            ],
            out_specs=pl.BlockSpec((tile_b, tile_f), lambda f, b, seed: (b, f)),
        ),
        compiler_params=pltpu.CompilerParams(
            dimension_semantics=("parallel", "parallel")),
    )(seed_arr, x_flat, pe_flat)
    return out_flat.reshape(B, S, D)


if __name__ == "__main__":
    B, S, D = 2, 8, 32
    p_drop = 0.1

    key = jax.random.PRNGKey(0)
    x = jax.random.normal(key, (B, S, D), dtype=jnp.float32)
    pe_table = make_pe_table(D, max_len=5000)

    ref = x + pe_table[None, :S, :]

    # Eval mode: dropout is identity -> must match the pure-JAX reference.
    out_eval = jax.block_until_ready(
        positional_encoding(x, pe_table, p=p_drop, training=False))
    assert out_eval.shape == (B, S, D) and out_eval.dtype == x.dtype
    assert jnp.allclose(out_eval, ref, atol=1e-6, rtol=1e-6), "eval-mode mismatch"

    # Train mode: every element is either 0 (dropped) or ref / (1 - p).
    out_train = jax.block_until_ready(
        positional_encoding(x, pe_table, p=p_drop, training=True, seed=0))
    assert out_train.shape == (B, S, D) and out_train.dtype == x.dtype
    scaled = ref / (1.0 - p_drop)
    is_zero = jnp.abs(out_train) <= 1e-6
    is_scaled = jnp.abs(out_train - scaled) <= 1e-5 * (1.0 + jnp.abs(scaled))
    assert bool(jnp.all(is_zero | is_scaled)), "train-mode values not {0, ref/(1-p)}"
    drop_frac = float(jnp.mean(jnp.logical_and(is_zero, jnp.logical_not(is_scaled))))
    assert drop_frac <= 0.4, f"implausible drop fraction {drop_frac} for p={p_drop}"

    print("KERNEL_OK")
</pallas_src>

<mosaic_0001>
module attributes {stable_mosaic.version = 11 : i64} {
  func.func @_pe_add_dropout_kernel(%arg0: i32, %arg1: i32, %arg2: memref<1xi32, #tpu.memory_space<smem>>, %arg3: memref<2x256xf32, #tpu.memory_space<vmem>>, %arg4: memref<1x256xf32, #tpu.memory_space<vmem>>, %arg5: memref<2x256xf32, #tpu.memory_space<vmem>>) attributes {dimension_semantics = [#tpu.dimension_semantics<parallel>, #tpu.dimension_semantics<parallel>], iteration_bounds = array<i64: 1, 1>, scalar_prefetch = 1 : i64, scratch_operands = 0 : i64, tpu.core_type = #tpu.core_type<tc>, window_params = [{transform_indices = @transform_0, window_bounds = array<i64: 2, 256>}, {transform_indices = @transform_1, window_bounds = array<i64: 1, 256>}, {transform_indices = @transform_2, window_bounds = array<i64: 2, 256>}]} {
    %c0 = arith.constant 0 : index
    %c0_0 = arith.constant 0 : index
    %0 = vector.load %arg3[%c0, %c0_0] : memref<2x256xf32, #tpu.memory_space<vmem>>, vector<2x256xf32>
    %c0_1 = arith.constant 0 : index
    %c0_2 = arith.constant 0 : index
    %1 = vector.load %arg4[%c0_1, %c0_2] : memref<1x256xf32, #tpu.memory_space<vmem>>, vector<1x256xf32>
    %2 = vector.broadcast %1 : vector<1x256xf32> to vector<2x256xf32>
    %3 = arith.addf %0, %2 : vector<2x256xf32>
    %c0_3 = arith.constant 0 : index
    %c0_4 = arith.constant 0 : index
    %4 = vector.load %arg5[%c0_3, %c0_4] : memref<2x256xf32, #tpu.memory_space<vmem>>, vector<2x256xf32>
    tpu.vector_store %arg5[%c0_3, %c0_4], %3 {strides = array<i32>} : memref<2x256xf32, #tpu.memory_space<vmem>>, vector<2x256xf32>,
    return
  }
  func.func @transform_0(%arg0: i32, %arg1: i32, %arg2: memref<1xi32, #tpu.memory_space<smem>>) -> (i32, i32) {
    %c0_i32 = arith.constant 0 : i32
    return %arg1, %arg0 : i32, i32
  }
  func.func @transform_1(%arg0: i32, %arg1: i32, %arg2: memref<1xi32, #tpu.memory_space<smem>>) -> (i32, i32) {
    %c0_i32 = arith.constant 0 : i32
    %c0_i32_0 = arith.constant 0 : i32
    return %c0_i32, %arg0 : i32, i32
  }
  func.func @transform_2(%arg0: i32, %arg1: i32, %arg2: memref<1xi32, #tpu.memory_space<smem>>) -> (i32, i32) {
    %c0_i32 = arith.constant 0 : i32
    return %arg1, %arg0 : i32, i32
  }
}

</mosaic_0001>

<llo_original>
// kernel: tpu_custom_call.1
$region0: #{tpu_custom_call.1}
  #allocation0 [shape = 'u32[]', space=smem, size = 0x4, offset = 0x4, fixed_abs, tag = 'smem constant byte address 0x4 - core index']
  #allocation1 [shape = 'u32[72,128]{1,0:T(1,128)}', space=vmem, size = 0x9000, scoped, tag = 'internal scratch']
  #allocation2 [shape = 's32[1]{0}', space=sflag, size = 0x4, scoped, tag = 'scoped memory for tpu_custom_call.1']
  #allocation3 [shape = 's32[1]{0:T(128)S(6)}', space=smem, size = 0x200, scoped, tag = 'prefetched SMEM operand 0']
  %s0 = inlined_call_operand.<no memory space> [shape: s32[1], index: 0, kind: input, shape index: {}]
  %s1 = inlined_call_operand.hbm [shape: f32[2,256], index: 1, kind: input, shape index: {}]
  %s2 = inlined_call_operand.vmem [shape: f32[1,256], index: 2, kind: input, shape index: {}]
  %s3 = inlined_call_operand.hbm [shape: f32[2,256], index: 3, kind: output, shape index: {}]
  %s4 = sld [smem:[#allocation0]]
  $region22: #{tpu_custom_call.1} parent=0
    _
  %s6 = ssub.s32 1, %s4
  %s7 = scalar_select 0, %s6, %s4
  %8 = sst [smem:[#allocation3]] %s0
  $region1: #{tpu_custom_call.1} parent=0
    #allocation4 [shape = 'u8[2048]{0}', space=vmem, size = 0x800, scoped, tag = 'input window, operand 1, single buffered']
    #allocation5 [shape = 's32[1]{0}', space=sflag, size = 0x4, scoped, tag = 'scoped memory for tpu_custom_call.1']
    #allocation6 [shape = 's32[1]{0}', space=sflag, size = 0x4, scoped, tag = 'scoped memory for tpu_custom_call.1']
    #allocation7 [shape = 'u8[2048]{0}', space=vmem, size = 0x800, scoped, tag = 'output window, operand 0, single buffered']
    %9 = vsyncpa [#allocation5], 0
    %10 = vsyncpa [#allocation6], 0
    // Predicated region
    $region2: #{tpu_custom_call.1} parent=1 // pred_check
      _
    $region3: #{tpu_custom_call.1} parent=1 // pred_check_branch
      %12 = sbr.rel (0) target = $region5
    $region4: #{tpu_custom_call.1} parent=1 // pred_region
      %14 = vsyncadd [#allocation5], 0
      %s16 = sshll.u32 %s1, 4
      %s17 = int_to_ptr.hbm [resolvable:$true] %s16
      %s18 = sshll.u32 [#allocation4], 4
      %s19 = int_to_ptr.vmem [resolvable:$true] %s18
      %21 = dma.hbm_to_vmem [thread:$0]  %s17, 64, %s19, [#allocation5]
    $region5: #{tpu_custom_call.1} parent=1 // pred_fallthru
      _
    // Predicated region
    $region6: #{tpu_custom_call.1} parent=1 // pred_check
      _
    $region7: #{tpu_custom_call.1} parent=1 // pred_check_branch
      %23 = sbr.rel (0) target = $region9
    $region8: #{tpu_custom_call.1} parent=1 // pred_region
      _
    $region9: #{tpu_custom_call.1} parent=1 // pred_fallthru
      _
    // Predicated region
    $region10: #{tpu_custom_call.1} parent=1 // pred_check
      _
    $region11: #{tpu_custom_call.1} parent=1 // pred_check_branch
      %25 = sbr.rel (0) target = $region13
    $region12: #{tpu_custom_call.1} parent=1 // pred_region
      %27 = dma.done [#allocation5], 64
    $region13: #{tpu_custom_call.1} parent=1 // pred_fallthru
      _
    %v28 = vld [vmem:[#allocation4] sm:$0xf]
    %v29 = vld [vmem:[%s2] sm:$0x3]
    %v31 = vperm.slane %v29, 0
    %v32 = vperm.slane %v29, 1
    %v33 = vrot.slane %v32, 6
    %vm34 = vcmask 1041408
    %v35 = vsel %vm34, %v31, %v33
    %v37 = vadd.f32 %v28, %v35
    %38 = vst [vmem:[#allocation7] sm:$0xf] %v37
    // Predicated region
    $region14: #{tpu_custom_call.1} parent=1 // pred_check
      _
    $region15: #{tpu_custom_call.1} parent=1 // pred_check_branch
      %40 = sbr.rel (0) target = $region17
    $region16: #{tpu_custom_call.1} parent=1 // pred_region
      %42 = vsyncadd [#allocation6], 0
      %s44 = sshll.u32 [#allocation7], 4
      %s45 = int_to_ptr.vmem [resolvable:$true] %s44
      %s46 = sshll.u32 %s3, 4
      %s47 = int_to_ptr.hbm [resolvable:$true] %s46
      %49 = dma.vmem_to_hbm [thread:$0]  %s45, 64, %s47, [#allocation6]
    $region17: #{tpu_custom_call.1} parent=1 // pred_fallthru
      _
    // Predicated region
    $region18: #{tpu_custom_call.1} parent=1 // pred_check
      _
    $region19: #{tpu_custom_call.1} parent=1 // pred_check_branch
      %51 = sbr.rel (0) target = $region21
    $region20: #{tpu_custom_call.1} parent=1 // pred_region
      %53 = dma.done [#allocation6], 64
    $region21: #{tpu_custom_call.1} parent=1 // pred_fallthru
      _
    %54 = vsyncpa [#allocation5], 1
    %55 = vsyncpa [#allocation6], 1

</llo_original>
